<compile_context>
chip_gen: v6e
topology: v6e:2x2x1
jax: 0.10.0
libtpu: 0.0.40
codegen_flags: <defaults>
</compile_context>

<pallas_src>
import functools
import math

import jax
import jax.numpy as jnp
from jax import lax
from jax.experimental import pallas as pl
from jax.experimental.pallas import tpu as pltpu


# ---------------------------------------------------------------------------
# Kernels
# ---------------------------------------------------------------------------
def _rows_kernel(g_ref, x_ref, o_ref, *, eps, epilogue):
    # g_ref: (1,1) scalar in SMEM.  x_ref/o_ref: (T, d); whole feature dim in
    # one block, per-row L2 norm via a last-axis reduction.
    x = x_ref[...].astype(jnp.float32)
    s = jnp.sum(x * x, axis=-1, keepdims=True)                  # (T, 1)
    inv = lax.rsqrt(jnp.maximum(s, eps * eps)) * g_ref[0, 0]    # fold g here
    y = x * inv
    if epilogue is not None:
        y = epilogue(y)
    o_ref[...] = y.astype(o_ref.dtype)


def _packed_kernel(g_ref, x_ref, o_ref, *, d, eps, epilogue):
    # x_ref/o_ref: (T, 128); each 128-lane row holds 128//d complete feature
    # rows.  Segmented (per-d-chunk) sum of squares via a hypercube butterfly
    # of lane rotations: exact f32, cross-lane traffic stays on the XLU.
    x = x_ref[...].astype(jnp.float32)
    s = x * x
    n_lanes = s.shape[-1]
    last_axis = s.ndim - 1                                      # positive axis!
    # (1, n_lanes) lane index; broadcasts into the selects (no tile-sized temp).
    lane = lax.broadcasted_iota(jnp.int32, (1, n_lanes), dimension=1)
    shift = 1
    while shift < d:
        left = pltpu.roll(s, shift=shift, axis=last_axis)            # s[l-shift]
        right = pltpu.roll(s, shift=n_lanes - shift, axis=last_axis)  # s[l+shift]
        s = s + jnp.where((lane & shift) != 0, left, right)
        shift *= 2
    inv = lax.rsqrt(jnp.maximum(s, eps * eps)) * g_ref[0, 0]
    y = x * inv
    if epilogue is not None:
        y = epilogue(y)
    o_ref[...] = y.astype(o_ref.dtype)


# ---------------------------------------------------------------------------
# Tiling / budget helpers (generation-aware)
# ---------------------------------------------------------------------------
def _vmem_capacity_bytes():
    try:
        return int(pltpu.get_tpu_info().vmem_capacity_bytes)
    except Exception:
        return 128 * 1024 * 1024            # v5e/v6e assumption if query fails


def _budget(itemsize):
    """(raw-input bytes per block target, scoped vmem limit)."""
    vmem = _vmem_capacity_bytes()
    if vmem <= 64 * 1024 * 1024:            # v7x: 64 MiB physical VMEM, 2 TCs
        elems, limit = 1 * 1024 * 1024, 40 * 1024 * 1024
    else:                                   # v5e/v6e: 128 MiB physical VMEM
        elems, limit = 3 * 512 * 1024, 48 * 1024 * 1024       # ~1.5M elements
    return elems * int(itemsize), limit


def _sublane(itemsize):
    # Sub-32-bit dtypes pack along sublanes: min tile second-to-last dim.
    return {4: 8, 2: 16, 1: 32}.get(int(itemsize), 8)


def _choose_block_rows(n_rows, row_bytes, itemsize, target_bytes):
    """Row tile: big (HBM-streaming), >=2 even grid steps when it matters,
    rounded up to the dtype sublane multiple."""
    sub = _sublane(itemsize)
    total = n_rows * row_bytes
    if total <= (1 << 20):                  # tiny: one block, splitting = overhead
        return n_rows
    steps = max(2, -(-total // target_bytes))
    steps += steps % 2                      # even -> balanced across v7x's 2 TCs
    t = -(-n_rows // steps)                 # ceil
    t = ((t + sub - 1) // sub) * sub        # round UP to sublane multiple
    return max(1, min(t, n_rows))


# ---------------------------------------------------------------------------
# Wrapper
# ---------------------------------------------------------------------------
def prescale_norm(x, g, eps=1e-5, *, block_rows=None, epilogue=None, fn=None):
    """PreScaleNorm forward: fn(x / max(||x||_2, eps) * g).

    x: (..., d) array.  g: scalar parameter (torch init: ones(1)).
    epilogue: optional *elementwise* function fused into the kernel.
    fn: optional arbitrary JAX function applied afterwards (not fused).
    """
    *lead, d = x.shape
    rows = math.prod(lead) if lead else 1
    x2 = x.reshape(rows, d)
    itemsize = x.dtype.itemsize

    pack = 128 // d if (d < 128 and 128 % d == 0) else 1
    if pack > 1 and rows % pack == 0:
        # Lane-dense packed view: [rows//pack, 128].
        r_view, c_view = rows // pack, 128
        kernel = functools.partial(_packed_kernel, d=d, eps=float(eps),
                                   epilogue=epilogue)
    else:
        # TODO(synk): for d that is neither a divisor nor a multiple of 128 the
        # store path uses masked partial stores; zero-pad d in the producer
        # (norm-preserving) if such shapes ever show up in real configs.
        r_view, c_view = rows, d
        kernel = functools.partial(_rows_kernel, eps=float(eps),
                                   epilogue=epilogue)
    xv = x2.reshape(r_view, c_view)

    target_bytes, vmem_limit = _budget(itemsize)
    if block_rows is not None:
        t = max(1, min(int(block_rows), r_view))
    else:
        t = _choose_block_rows(r_view, c_view * itemsize, itemsize, target_bytes)
    grid = (pl.cdiv(r_view, t),)

    g_arr = jnp.asarray(g, jnp.float32).reshape(1, 1)

    out = pl.pallas_call(
        kernel,
        out_shape=jax.ShapeDtypeStruct((r_view, c_view), x.dtype),
        grid_spec=pltpu.PrefetchScalarGridSpec(
            num_scalar_prefetch=0,
            grid=grid,
            in_specs=[
                pl.BlockSpec(memory_space=pltpu.MemorySpace.SMEM),  # g (scalar)
                pl.BlockSpec((t, c_view), lambda i: (i, 0)),        # x row tile
            ],
            out_specs=pl.BlockSpec((t, c_view), lambda i: (i, 0)),
        ),
        compiler_params=pltpu.CompilerParams(
            dimension_semantics=("parallel",),
            vmem_limit_bytes=vmem_limit,
        ),
        cost_estimate=pl.CostEstimate(
            flops=3 * rows * d,
            transcendentals=rows,
            bytes_accessed=2 * rows * d * itemsize,
        ),
    )(g_arr, xv)

    out = out.reshape(x.shape)
    # TODO(synk): the PyTorch `fn` is an arbitrary wrapped module (attention /
    # feed-forward in Performer); non-elementwise fns are composed here in
    # plain JAX instead of being fused into the kernel.  For the full win,
    # fuse this norm as the prologue of the downstream projection kernel.
    if fn is not None:
        out = fn(out)
    return out


# ---------------------------------------------------------------------------
# Reference + self-test
# ---------------------------------------------------------------------------
def _reference(x, g, eps=1e-5):
    xf = x.astype(jnp.float32)
    n = jnp.sqrt(jnp.sum(xf * xf, axis=-1, keepdims=True))
    n = jnp.maximum(n, eps)
    return (xf / n * g).astype(x.dtype)


if __name__ == "__main__":
    key = jax.random.PRNGKey(0)
    g = jnp.ones((), jnp.float32)          # nn.Parameter(torch.ones(1))
    eps = 1e-5
    k1, k2, k3 = jax.random.split(key, 3)

    # 1) Module-sized demo: batch=2, seq=8, dim=32  (lane-packed path, pack=4).
    x1 = jax.random.normal(k1, (2, 8, 32), dtype=jnp.float32)
    o1 = jax.block_until_ready(prescale_norm(x1, g, eps))
    assert o1.shape == x1.shape and o1.dtype == x1.dtype
    assert jnp.allclose(o1, _reference(x1, g, eps), atol=1e-5, rtol=1e-5)

    # 2) Packed path with multiple grid steps and a partial final block:
    #    rows=200, d=64 -> pack=2, packed rows=100, tile=32 -> grid=4.
    x2 = jax.random.normal(k2, (2, 100, 64), dtype=jnp.float32)
    o2 = jax.block_until_ready(prescale_norm(x2, g, eps, block_rows=32))
    assert jnp.allclose(o2, _reference(x2, g, eps), atol=1e-5, rtol=1e-5)

    # 3) Fallback whole-row path (d=48 neither divides nor is a multiple of
    #    128), with a fused elementwise epilogue standing in for `fn`.
    x3 = jax.random.normal(k3, (2, 24, 48), dtype=jnp.float32)
    relu = lambda v: jnp.maximum(v, 0.0)
    o3 = jax.block_until_ready(prescale_norm(x3, g, eps, epilogue=relu))
    assert jnp.allclose(o3, relu(_reference(x3, g, eps)), atol=1e-5, rtol=1e-5)

    print("KERNEL_OK")
</pallas_src>

<mosaic_0001>
module attributes {stable_mosaic.version = 11 : i64} {
  func.func @_packed_kernel(%arg0: i32, %arg1: memref<1x1xf32, #tpu.memory_space<smem>>, %arg2: memref<4x128xf32, #tpu.memory_space<vmem>>, %arg3: memref<4x128xf32, #tpu.memory_space<vmem>>) attributes {dimension_semantics = [#tpu.dimension_semantics<parallel>], iteration_bounds = array<i64: 1>, scalar_prefetch = 0 : i64, scratch_operands = 0 : i64, tpu.core_type = #tpu.core_type<tc>, window_params = [{transform_indices = @transform_0, window_bounds = array<i64: 1, 1>}, {transform_indices = @transform_1, window_bounds = array<i64: 4, 128>}, {transform_indices = @transform_2, window_bounds = array<i64: 4, 128>}]} {
    %c0 = arith.constant 0 : index
    %c0_0 = arith.constant 0 : index
    %0 = vector.load %arg2[%c0, %c0_0] : memref<4x128xf32, #tpu.memory_space<vmem>>, vector<4x128xf32>
    %1 = arith.mulf %0, %0 : vector<4x128xf32>
    %2 = tpu.iota {dimensions = array<i32: 1>} : vector<1x128xi32>
    %c1_i32 = arith.constant 1 : i32
    %3 = tpu.dynamic_rotate %1 by %c1_i32 dim 1 : vector<4x128xf32>, i32 -> vector<4x128xf32>
    %c127_i32 = arith.constant 127 : i32
    %4 = tpu.dynamic_rotate %1 by %c127_i32 dim 1 : vector<4x128xf32>, i32 -> vector<4x128xf32>
    %c1_i32_1 = arith.constant 1 : i32
    %5 = vector.broadcast %c1_i32_1 : i32 to vector<1x128xi32>
    %6 = arith.andi %2, %5 : vector<1x128xi32>
    %c0_i32 = arith.constant 0 : i32
    %7 = vector.broadcast %c0_i32 : i32 to vector<1x128xi32>
    %8 = arith.cmpi ne, %6, %7 : vector<1x128xi32>
    %9 = vector.shape_cast %8 : vector<1x128xi1> to vector<1x128xi1>
    %10 = vector.broadcast %9 : vector<1x128xi1> to vector<4x128xi1>
    %11 = arith.select %10, %3, %4 : vector<4x128xi1>, vector<4x128xf32>
    %12 = arith.addf %1, %11 : vector<4x128xf32>
    %c2_i32 = arith.constant 2 : i32
    %13 = tpu.dynamic_rotate %12 by %c2_i32 dim 1 : vector<4x128xf32>, i32 -> vector<4x128xf32>
    %c126_i32 = arith.constant 126 : i32
    %14 = tpu.dynamic_rotate %12 by %c126_i32 dim 1 : vector<4x128xf32>, i32 -> vector<4x128xf32>
    %c2_i32_2 = arith.constant 2 : i32
    %15 = vector.broadcast %c2_i32_2 : i32 to vector<1x128xi32>
    %16 = arith.andi %2, %15 : vector<1x128xi32>
    %c0_i32_3 = arith.constant 0 : i32
    %17 = vector.broadcast %c0_i32_3 : i32 to vector<1x128xi32>
    %18 = arith.cmpi ne, %16, %17 : vector<1x128xi32>
    %19 = vector.shape_cast %18 : vector<1x128xi1> to vector<1x128xi1>
    %20 = vector.broadcast %19 : vector<1x128xi1> to vector<4x128xi1>
    %21 = arith.select %20, %13, %14 : vector<4x128xi1>, vector<4x128xf32>
    %22 = arith.addf %12, %21 : vector<4x128xf32>
    %c4_i32 = arith.constant 4 : i32
    %23 = tpu.dynamic_rotate %22 by %c4_i32 dim 1 : vector<4x128xf32>, i32 -> vector<4x128xf32>
    %c124_i32 = arith.constant 124 : i32
    %24 = tpu.dynamic_rotate %22 by %c124_i32 dim 1 : vector<4x128xf32>, i32 -> vector<4x128xf32>
    %c4_i32_4 = arith.constant 4 : i32
    %25 = vector.broadcast %c4_i32_4 : i32 to vector<1x128xi32>
    %26 = arith.andi %2, %25 : vector<1x128xi32>
    %c0_i32_5 = arith.constant 0 : i32
    %27 = vector.broadcast %c0_i32_5 : i32 to vector<1x128xi32>
    %28 = arith.cmpi ne, %26, %27 : vector<1x128xi32>
    %29 = vector.shape_cast %28 : vector<1x128xi1> to vector<1x128xi1>
    %30 = vector.broadcast %29 : vector<1x128xi1> to vector<4x128xi1>
    %31 = arith.select %30, %23, %24 : vector<4x128xi1>, vector<4x128xf32>
    %32 = arith.addf %22, %31 : vector<4x128xf32>
    %c8_i32 = arith.constant 8 : i32
    %33 = tpu.dynamic_rotate %32 by %c8_i32 dim 1 : vector<4x128xf32>, i32 -> vector<4x128xf32>
    %c120_i32 = arith.constant 120 : i32
    %34 = tpu.dynamic_rotate %32 by %c120_i32 dim 1 : vector<4x128xf32>, i32 -> vector<4x128xf32>
    %c8_i32_6 = arith.constant 8 : i32
    %35 = vector.broadcast %c8_i32_6 : i32 to vector<1x128xi32>
    %36 = arith.andi %2, %35 : vector<1x128xi32>
    %c0_i32_7 = arith.constant 0 : i32
    %37 = vector.broadcast %c0_i32_7 : i32 to vector<1x128xi32>
    %38 = arith.cmpi ne, %36, %37 : vector<1x128xi32>
    %39 = vector.shape_cast %38 : vector<1x128xi1> to vector<1x128xi1>
    %40 = vector.broadcast %39 : vector<1x128xi1> to vector<4x128xi1>
    %41 = arith.select %40, %33, %34 : vector<4x128xi1>, vector<4x128xf32>
    %42 = arith.addf %32, %41 : vector<4x128xf32>
    %c16_i32 = arith.constant 16 : i32
    %43 = tpu.dynamic_rotate %42 by %c16_i32 dim 1 : vector<4x128xf32>, i32 -> vector<4x128xf32>
    %c112_i32 = arith.constant 112 : i32
    %44 = tpu.dynamic_rotate %42 by %c112_i32 dim 1 : vector<4x128xf32>, i32 -> vector<4x128xf32>
    %c16_i32_8 = arith.constant 16 : i32
    %45 = vector.broadcast %c16_i32_8 : i32 to vector<1x128xi32>
    %46 = arith.andi %2, %45 : vector<1x128xi32>
    %c0_i32_9 = arith.constant 0 : i32
    %47 = vector.broadcast %c0_i32_9 : i32 to vector<1x128xi32>
    %48 = arith.cmpi ne, %46, %47 : vector<1x128xi32>
    %49 = vector.shape_cast %48 : vector<1x128xi1> to vector<1x128xi1>
    %50 = vector.broadcast %49 : vector<1x128xi1> to vector<4x128xi1>
    %51 = arith.select %50, %43, %44 : vector<4x128xi1>, vector<4x128xf32>
    %52 = arith.addf %42, %51 : vector<4x128xf32>
    %cst = arith.constant 1.000000e-10 : f32
    %53 = vector.broadcast %cst : f32 to vector<4x128xf32>
    %54 = arith.maximumf %52, %53 : vector<4x128xf32>
    %55 = math.rsqrt %54 : vector<4x128xf32>
    %c0_10 = arith.constant 0 : index
    %c0_11 = arith.constant 0 : index
    %56 = memref.load %arg1[%c0_10, %c0_11] : memref<1x1xf32, #tpu.memory_space<smem>>
    %57 = vector.broadcast %56 : f32 to vector<4x128xf32>
    %58 = arith.mulf %55, %57 : vector<4x128xf32>
    %59 = arith.mulf %0, %58 : vector<4x128xf32>
    %c0_12 = arith.constant 0 : index
    %c0_13 = arith.constant 0 : index
    %60 = vector.load %arg3[%c0_12, %c0_13] : memref<4x128xf32, #tpu.memory_space<vmem>>, vector<4x128xf32>
    tpu.vector_store %arg3[%c0_12, %c0_13], %59 {strides = array<i32>} : memref<4x128xf32, #tpu.memory_space<vmem>>, vector<4x128xf32>,
    return
  }
  func.func @transform_0(%arg0: i32) -> (i32, i32) {
    %c0_i32 = arith.constant 0 : i32
    %c0_i32_0 = arith.constant 0 : i32
    %c0_i32_1 = arith.constant 0 : i32
    return %c0_i32, %c0_i32_0 : i32, i32
  }
  func.func @transform_1(%arg0: i32) -> (i32, i32) {
    %c0_i32 = arith.constant 0 : i32
    %c0_i32_0 = arith.constant 0 : i32
    return %arg0, %c0_i32 : i32, i32
  }
  func.func @transform_2(%arg0: i32) -> (i32, i32) {
    %c0_i32 = arith.constant 0 : i32
    %c0_i32_0 = arith.constant 0 : i32
    return %arg0, %c0_i32 : i32, i32
  }
}

</mosaic_0001>

<llo_original>
// kernel: tpu_custom_call.1
$region0: #{tpu_custom_call.1}
  #allocation0 [shape = 'u32[]', space=smem, size = 0x4, offset = 0x4, fixed_abs, tag = 'smem constant byte address 0x4 - core index']
  #allocation1 [shape = 'u32[144,128]{1,0:T(1,128)}', space=vmem, size = 0x12000, scoped, tag = 'internal scratch']
  #allocation2 [shape = 'f32[1,1]{1,0:T(1,128)S(6)}', space=smem, size = 0x200, scoped, tag = 'scoped memory for tpu_custom_call.1']
  %s0 = inlined_call_operand.<no memory space> [shape: f32[1,1], index: 0, kind: input, shape index: {}]
  %s1 = inlined_call_operand.hbm [shape: f32[4,128], index: 1, kind: input, shape index: {}]
  %s2 = inlined_call_operand.hbm [shape: f32[4,128], index: 2, kind: output, shape index: {}]
  %s3 = sld [smem:[#allocation0]]
  $region22: #{tpu_custom_call.1} parent=0
    _
  %s5 = ssub.s32 1, %s3
  %s6 = scalar_select 0, %s5, %s3
  %7 = sst [smem:[#allocation2]] %s0
  $region1: #{tpu_custom_call.1} parent=0
    #allocation3 [shape = 'u8[2048]{0}', space=vmem, size = 0x800, scoped, tag = 'input window, operand 1, single buffered']
    #allocation4 [shape = 's32[1]{0}', space=sflag, size = 0x4, scoped, tag = 'scoped memory for tpu_custom_call.1']
    #allocation5 [shape = 's32[1]{0}', space=sflag, size = 0x4, scoped, tag = 'scoped memory for tpu_custom_call.1']
    #allocation6 [shape = 'u8[2048]{0}', space=vmem, size = 0x800, scoped, tag = 'output window, operand 0, single buffered']
    %8 = vsyncpa [#allocation4], 0
    %9 = vsyncpa [#allocation5], 0
    // Predicated region
    $region2: #{tpu_custom_call.1} parent=1 // pred_check
      _
    $region3: #{tpu_custom_call.1} parent=1 // pred_check_branch
      %11 = sbr.rel (0) target = $region5
    $region4: #{tpu_custom_call.1} parent=1 // pred_region
      _
    $region5: #{tpu_custom_call.1} parent=1 // pred_fallthru
      _
    // Predicated region
    $region6: #{tpu_custom_call.1} parent=1 // pred_check
      _
    $region7: #{tpu_custom_call.1} parent=1 // pred_check_branch
      %13 = sbr.rel (0) target = $region9
    $region8: #{tpu_custom_call.1} parent=1 // pred_region
      %s15 = ssub.s32 64, 64
      %16 = vsyncadd [#allocation4], %s15
      %s18 = sshll.u32 [#allocation3], 4
      %s19 = int_to_ptr.vmem [resolvable:$true] %s18
      %21 = dma.hbm_to_vmem [thread:$0]  %s1, 64, %s19, [#allocation4]
    $region9: #{tpu_custom_call.1} parent=1 // pred_fallthru
      _
    // Predicated region
    $region10: #{tpu_custom_call.1} parent=1 // pred_check
      _
    $region11: #{tpu_custom_call.1} parent=1 // pred_check_branch
      %23 = sbr.rel (0) target = $region13
    $region12: #{tpu_custom_call.1} parent=1 // pred_region
      %24 = dma.done [#allocation4], 64
    $region13: #{tpu_custom_call.1} parent=1 // pred_fallthru
      _
    %v25 = vld [vmem:[#allocation3] sm:$0xf]
    %v26 = vmul.f32 %v25, %v25
    %v27 = vlaneseq
    %v28 = vand.u32 %v27, 127
    %29 = vrot.lane.b32.xlu0 %v26, 1
    %v30 = vpop.permute.xlu0 %29
    %31 = vrot.lane.b32.xlu0 %v26, 127
    %v32 = vpop.permute.xlu0 %31
    %v33 = vand.u32 %v28, 1
    %vm34 = vcmp.ne.s32.totalorder %v33, 0
    %v35 = vsel %vm34, 1, 0
    %vm36 = vcmp.eq.s32.totalorder %v35, 1
    %v37 = vsel %vm36, %v30, %v32
    %v38 = vadd.f32 %v26, %v37
    %39 = vrot.lane.b32.xlu0 %v38, 2
    %v40 = vpop.permute.xlu0 %39
    %41 = vrot.lane.b32.xlu0 %v38, 126
    %v42 = vpop.permute.xlu0 %41
    %v43 = vand.u32 %v28, 2
    %vm44 = vcmp.ne.s32.totalorder %v43, 0
    %v45 = vsel %vm44, 1, 0
    %vm46 = vcmp.eq.s32.totalorder %v45, 1
    %v47 = vsel %vm46, %v40, %v42
    %v48 = vadd.f32 %v38, %v47
    %49 = vrot.lane.b32.xlu0 %v48, 4
    %v50 = vpop.permute.xlu0 %49
    %51 = vrot.lane.b32.xlu0 %v48, 124
    %v52 = vpop.permute.xlu0 %51
    %v53 = vand.u32 %v28, 4
    %vm54 = vcmp.ne.s32.totalorder %v53, 0
    %v55 = vsel %vm54, 1, 0
    %vm56 = vcmp.eq.s32.totalorder %v55, 1
    %v57 = vsel %vm56, %v50, %v52
    %v58 = vadd.f32 %v48, %v57
    %59 = vrot.lane.b32.xlu0 %v58, 8
    %v60 = vpop.permute.xlu0 %59
    %61 = vrot.lane.b32.xlu0 %v58, 120
    %v62 = vpop.permute.xlu0 %61
    %v63 = vand.u32 %v28, 8
    %vm64 = vcmp.ne.s32.totalorder %v63, 0
    %v65 = vsel %vm64, 1, 0
    %vm66 = vcmp.eq.s32.totalorder %v65, 1
    %v67 = vsel %vm66, %v60, %v62
    %v68 = vadd.f32 %v58, %v67
    %69 = vrot.lane.b32.xlu0 %v68, 16
    %v70 = vpop.permute.xlu0 %69
    %71 = vrot.lane.b32.xlu0 %v68, 112
    %v72 = vpop.permute.xlu0 %71
    %v73 = vand.u32 %v28, 16
    %vm74 = vcmp.ne.s32.totalorder %v73, 0
    %v75 = vsel %vm74, 1, 0
    %vm76 = vcmp.eq.s32.totalorder %v75, 1
    %v77 = vsel %vm76, %v70, %v72
    %v78 = vadd.f32 %v68, %v77
    %v79 = vmax.f32 %v78, 1e-10
    %v80 = vrsqrt.pop %v79
    %s81 = sld [smem:[#allocation2]]
    %v82 = vstv %s81
    %v83 = vmul.f32 %v80, %v82
    %v84 = vmul.f32 %v25, %v83
    %85 = vst [vmem:[#allocation6] sm:$0xf] %v84
    // Predicated region
    $region14: #{tpu_custom_call.1} parent=1 // pred_check
      _
    $region15: #{tpu_custom_call.1} parent=1 // pred_check_branch
      %87 = sbr.rel (0) target = $region17
    $region16: #{tpu_custom_call.1} parent=1 // pred_region
      %s89 = ssub.s32 64, 64
      %90 = vsyncadd [#allocation5], %s89
      %s92 = sshll.u32 [#allocation6], 4
      %s93 = int_to_ptr.vmem [resolvable:$true] %s92
      %95 = dma.vmem_to_hbm [thread:$0]  %s93, 64, %s2, [#allocation5]
    $region17: #{tpu_custom_call.1} parent=1 // pred_fallthru
      _
    // Predicated region
    $region18: #{tpu_custom_call.1} parent=1 // pred_check
      _
    $region19: #{tpu_custom_call.1} parent=1 // pred_check_branch
      %97 = sbr.rel (0) target = $region21
    $region20: #{tpu_custom_call.1} parent=1 // pred_region
      %98 = dma.done [#allocation5], 64
    $region21: #{tpu_custom_call.1} parent=1 // pred_fallthru
      _
    %99 = vsyncpa [#allocation4], 1
    %100 = vsyncpa [#allocation5], 1

</llo_original>
